<compile_context>
chip_gen: v7x
topology: tpu7x:2x2x1
jax: 0.10.0
libtpu: 0.0.40
codegen_flags: <defaults>
</compile_context>

<pallas_src>
import functools
import math

import jax
import jax.numpy as jnp
from jax.experimental import pallas as pl
from jax.experimental.pallas import tpu as pltpu

SMOOTHING = 0.1          # stands in for config.smooth
SIZE = 2                 # number of classes (module default)

LANES = 128
MAX_TILE_ROWS = 4096     # 4096*128: 2 MiB f32 logits + 0.5 MiB int8 one-hot per step


def _cdiv(a, b):
    return -(-a // b)


def _round_up(a, b):
    return _cdiv(a, b) * b


def _ls_kl_kernel(x_ref, hit_ref, out_ref, *, total_lanes, tile_rows, smooth, conf):
    """One grid step: lane-wise partial sum of true_dist * log_softmax.

    Layout: flat (rows, 128) view of the contiguous (N, 2) logits, so lane 2k
    holds class-0 and lane 2k+1 holds class-1 of one sample.  Each lane
    computes td[i, c(lane)] * log_softmax(x)[i, c(lane)]; summing all lanes
    therefore yields sum_i sum_c td * log_softmax with no double counting.
    """
    i = pl.program_id(0)
    last = pl.num_programs(0) - 1

    x = x_ref[...].astype(jnp.float32)              # (T, 128) logits (f32/bf16 in HBM)
    hitf = hit_ref[...].astype(jnp.float32)         # (T, 128) one-hot(target) in {0,1}

    lane = jax.lax.broadcasted_iota(jnp.int32, x.shape, 1)
    is_even = (lane & 1) == 0
    # Pair partner lives in the neighbouring lane (lane ^ 1); XLU lane rotates.
    nxt = pltpu.roll(x, LANES - 1, axis=1)           # lane l -> x[l + 1]
    prv = pltpu.roll(x, 1, axis=1)                   # lane l -> x[l - 1]
    partner = jnp.where(is_even, nxt, prv)

    # Numerically stable 2-class log-sum-exp, symmetric in (x, partner).
    lse = jnp.maximum(x, partner) + jnp.log1p(jnp.exp(-jnp.abs(x - partner)))
    # true_dist weight per lane: confidence on the target class, smoothing otherwise.
    w = smooth + (conf - smooth) * hitf
    contrib = (x - lse) * w                          # td[i,c] * log_softmax(x)[i,c]

    @pl.when(i != last)
    def _full_tile():
        partial = jnp.sum(contrib, axis=0, keepdims=True)        # (1, 128)
        out_ref[0] = jnp.broadcast_to(partial, (8, LANES))

    @pl.when(i == last)
    def _masked_tail_tile():
        # Only the last tile pays for the tail mask (zero-padded lanes and any
        # out-of-bounds rows of a partial boundary block).
        row = jax.lax.broadcasted_iota(jnp.int32, x.shape, 0)
        flat = (i * tile_rows + row) * LANES + lane
        masked = jnp.where(flat < total_lanes, contrib, jnp.float32(0.0))
        partial = jnp.sum(masked, axis=0, keepdims=True)
        out_ref[0] = jnp.broadcast_to(partial, (8, LANES))


@functools.partial(jax.jit, static_argnames=("smoothing",))
def label_smoothing_loss(x, target, *, smoothing=SMOOTHING):
    """x: (N, 2) float (f32 or bf16), target: (N,) int. Returns scalar f32 loss."""
    n, c = x.shape
    assert c == SIZE == 2, "kernel is specialized to the module's size=2"
    conf = 1.0 - smoothing
    s = smoothing / (c - 1)
    # Entropy part of KL per sample (0*log(0) := 0), closed form at trace time.
    per_sample_const = (conf * math.log(conf) if conf > 0.0 else 0.0) + \
                       (c - 1) * (s * math.log(s) if s > 0.0 else 0.0)

    # int8 one-hot "is this lane the target class" -> 1 B/lane of HBM traffic.
    cls = jax.lax.broadcasted_iota(jnp.int32, (n, c), 1)
    hit = (cls == target.astype(jnp.int32)[:, None]).astype(jnp.int8)

    # Interleaved lane-dense layout: the contiguous (N, 2) buffer viewed as
    # (rows, 128).  When 2N % 128 == 0 this is a pure reshape (no copy).
    total_lanes = n * c
    rows = _cdiv(total_lanes, LANES)
    pad = rows * LANES - total_lanes
    flat_x = x.reshape(-1)
    flat_h = hit.reshape(-1)
    if pad:
        flat_x = jnp.pad(flat_x, (0, pad))
        flat_h = jnp.pad(flat_h, (0, pad))
    xs = flat_x.reshape(rows, LANES)
    hs = flat_h.reshape(rows, LANES)

    # Tile selection: big tiles to amortize per-step overhead; >=2 tiles when
    # there is enough work so v7x's two TensorCores can split the grid.
    if rows <= 64:
        tile_rows = rows                              # full-dim block, any row count
    else:
        tile_rows = min(MAX_TILE_ROWS, _round_up(_cdiv(rows, 2), 32))
    num_tiles = _cdiv(rows, tile_rows)

    kernel = functools.partial(
        _ls_kl_kernel,
        total_lanes=total_lanes, tile_rows=tile_rows,
        smooth=float(s), conf=float(conf))

    partials = pl.pallas_call(
        kernel,
        out_shape=jax.ShapeDtypeStruct((num_tiles, 8, LANES), jnp.float32),
        grid=(num_tiles,),
        in_specs=[
            pl.BlockSpec((tile_rows, LANES), lambda i: (i, 0)),
            pl.BlockSpec((tile_rows, LANES), lambda i: (i, 0)),
        ],
        out_specs=pl.BlockSpec((1, 8, LANES), lambda i: (i, 0, 0)),
        compiler_params=pltpu.CompilerParams(
            # Independent per-tile partial sums -> grid can be sharded across
            # TensorCores (v7x has 2); reduction finishes in XLA below.
            dimension_semantics=("parallel",)),
    )(xs, hs)

    # Rows 1..7 of each tile's (8, 128) block replicate row 0; read row 0 only.
    cross = jnp.sum(partials[:, 0, :])                # sum_i sum_c td * log_softmax
    return jnp.float32(per_sample_const) - cross / jnp.float32(n)


def label_smoothing_loss_ref(x, target, *, smoothing=SMOOTHING):
    """Pure-JAX reference matching the PyTorch module."""
    n, c = x.shape
    confidence = 1.0 - smoothing
    true_dist = jnp.full((n, c), smoothing / (c - 1), dtype=jnp.float32)
    true_dist = true_dist.at[jnp.arange(n), target].set(confidence)
    log_sm = jax.nn.log_softmax(x.astype(jnp.float32), axis=-1)
    kl = jnp.where(true_dist > 0, true_dist * (jnp.log(true_dist) - log_sm), 0.0)
    return jnp.sum(kl) / n


if __name__ == "__main__":
    key = jax.random.PRNGKey(0)
    kx, kt = jax.random.split(key)

    # Small shape matching the module (batch=8, size=2 classes).
    N = 8
    x = jax.random.normal(kx, (N, SIZE), dtype=jnp.float32)
    target = jax.random.randint(kt, (N,), 0, SIZE, dtype=jnp.int32)

    loss = label_smoothing_loss(x, target)
    jax.block_until_ready(loss)
    ref = label_smoothing_loss_ref(x, target)
    assert jnp.allclose(loss, ref, rtol=1e-5, atol=1e-5), (loss, ref)

    # Padded-tail check: multiple lane-rows, single tile.
    N2 = 300
    x2 = jax.random.normal(kx, (N2, SIZE), dtype=jnp.float32)
    t2 = jax.random.randint(kt, (N2,), 0, SIZE, dtype=jnp.int32)
    loss2 = label_smoothing_loss(x2, t2)
    jax.block_until_ready(loss2)
    ref2 = label_smoothing_loss_ref(x2, t2)
    assert jnp.allclose(loss2, ref2, rtol=1e-5, atol=1e-5), (loss2, ref2)

    # Multi-tile check: exercises the parallel grid, the partial boundary
    # block and the last-tile-only masking.
    N3 = 4801
    x3 = jax.random.normal(kx, (N3, SIZE), dtype=jnp.float32)
    t3 = jax.random.randint(kt, (N3,), 0, SIZE, dtype=jnp.int32)
    loss3 = label_smoothing_loss(x3, t3)
    jax.block_until_ready(loss3)
    ref3 = label_smoothing_loss_ref(x3, t3)
    assert jnp.allclose(loss3, ref3, rtol=1e-5, atol=1e-5), (loss3, ref3)

    # bf16-logit path (upcast happens in-kernel; reference sees the same values).
    x2b = x2.astype(jnp.bfloat16)
    loss4 = label_smoothing_loss(x2b, t2)
    jax.block_until_ready(loss4)
    ref4 = label_smoothing_loss_ref(x2b, t2)
    assert jnp.allclose(loss4, ref4, rtol=1e-4, atol=1e-4), (loss4, ref4)

    print("KERNEL_OK")
</pallas_src>

<mosaic_0001>
module attributes {stable_mosaic.version = 11 : i64} {
  func.func @_ls_kl_kernel(%arg0: i32, %arg1: memref<1x128xf32, #tpu.memory_space<vmem>>, %arg2: memref<1x128xi8, #tpu.memory_space<vmem>>, %arg3: memref<1x8x128xf32, #tpu.memory_space<vmem>>) attributes {dimension_semantics = [#tpu.dimension_semantics<parallel>], iteration_bounds = array<i64: 1>, scalar_prefetch = 0 : i64, scratch_operands = 0 : i64, tpu.core_type = #tpu.core_type<tc>, window_params = [{transform_indices = @transform_0, window_bounds = array<i64: 1, 128>}, {transform_indices = @transform_1, window_bounds = array<i64: 1, 128>}, {transform_indices = @transform_2, window_bounds = array<i64: 1, 8, 128>}]} {
    %c0 = arith.constant 0 : index
    %c0_0 = arith.constant 0 : index
    %0 = vector.load %arg1[%c0, %c0_0] : memref<1x128xf32, #tpu.memory_space<vmem>>, vector<1x128xf32>
    %c0_1 = arith.constant 0 : index
    %c0_2 = arith.constant 0 : index
    %1 = vector.load %arg2[%c0_1, %c0_2] : memref<1x128xi8, #tpu.memory_space<vmem>>, vector<1x128xi8>
    %2 = arith.sitofp %1 : vector<1x128xi8> to vector<1x128xf32>
    %3 = tpu.iota {dimensions = array<i32: 1>} : vector<1x128xi32>
    %c1_i32 = arith.constant 1 : i32
    %4 = vector.broadcast %c1_i32 : i32 to vector<1x128xi32>
    %5 = arith.andi %3, %4 : vector<1x128xi32>
    %c0_i32 = arith.constant 0 : i32
    %6 = vector.broadcast %c0_i32 : i32 to vector<1x128xi32>
    %7 = arith.cmpi eq, %5, %6 : vector<1x128xi32>
    %c127_i32 = arith.constant 127 : i32
    %8 = tpu.dynamic_rotate %0 by %c127_i32 dim 1 : vector<1x128xf32>, i32 -> vector<1x128xf32>
    %c1_i32_3 = arith.constant 1 : i32
    %9 = tpu.dynamic_rotate %0 by %c1_i32_3 dim 1 : vector<1x128xf32>, i32 -> vector<1x128xf32>
    %10 = arith.select %7, %8, %9 : vector<1x128xi1>, vector<1x128xf32>
    %11 = arith.maximumf %0, %10 : vector<1x128xf32>
    %12 = arith.subf %0, %10 : vector<1x128xf32>
    %13 = math.absf %12 : vector<1x128xf32>
    %cst = arith.constant 0.000000e+00 : f32
    %14 = vector.broadcast %cst : f32 to vector<1x128xf32>
    %15 = arith.subf %14, %13 : vector<1x128xf32>
    %16 = math.exp %15 : vector<1x128xf32>
    %17 = math.log1p %16 : vector<1x128xf32>
    %18 = arith.addf %11, %17 : vector<1x128xf32>
    %cst_4 = arith.constant 8.000000e-01 : f32
    %19 = vector.broadcast %cst_4 : f32 to vector<1x128xf32>
    %20 = arith.mulf %19, %2 : vector<1x128xf32>
    %cst_5 = arith.constant 1.000000e-01 : f32
    %21 = vector.broadcast %cst_5 : f32 to vector<1x128xf32>
    %22 = arith.addf %21, %20 : vector<1x128xf32>
    %23 = arith.subf %0, %18 : vector<1x128xf32>
    %24 = arith.mulf %23, %22 : vector<1x128xf32>
    %c0_i32_6 = arith.constant 0 : i32
    %25 = arith.cmpi ne, %arg0, %c0_i32_6 : i32
    %26 = arith.extui %25 : i1 to i32
    %c0_i32_7 = arith.constant 0 : i32
    %27 = arith.cmpi ne, %26, %c0_i32_7 : i32
    scf.if %27 {
      %cst_10 = arith.constant dense<0.000000e+00> : vector<128xf32>
      %31 = vector.multi_reduction <add>, %24, %cst_10 [0] : vector<1x128xf32> to vector<128xf32>
      %32 = vector.shape_cast %31 : vector<128xf32> to vector<1x128xf32>
      %33 = vector.shape_cast %32 : vector<1x128xf32> to vector<1x128xf32>
      %34 = vector.broadcast %33 : vector<1x128xf32> to vector<8x128xf32>
      %c0_11 = arith.constant 0 : index
      %c0_12 = arith.constant 0 : index
      %c0_13 = arith.constant 0 : index
      %35 = vector.load %arg3[%c0_11, %c0_12, %c0_13] : memref<1x8x128xf32, #tpu.memory_space<vmem>>, vector<1x8x128xf32>
      %36 = vector.shape_cast %35 : vector<1x8x128xf32> to vector<8x128xf32>
      %37 = vector.shape_cast %34 : vector<8x128xf32> to vector<1x8x128xf32>
      tpu.vector_store %arg3[%c0_11, %c0_12, %c0_13], %37 {strides = array<i32>} : memref<1x8x128xf32, #tpu.memory_space<vmem>>, vector<1x8x128xf32>,
    } else {
    }
    %c0_i32_8 = arith.constant 0 : i32
    %28 = arith.cmpi eq, %arg0, %c0_i32_8 : i32
    %29 = arith.extui %28 : i1 to i32
    %c0_i32_9 = arith.constant 0 : i32
    %30 = arith.cmpi ne, %29, %c0_i32_9 : i32
    scf.if %30 {
      %31 = tpu.iota {dimensions = array<i32: 0>} : vector<1x128xi32>
      %c1_i32_10 = arith.constant 1 : i32
      %32 = arith.muli %arg0, %c1_i32_10 : i32
      %33 = vector.broadcast %32 : i32 to vector<1x128xi32>
      %34 = arith.addi %33, %31 : vector<1x128xi32>
      %c128_i32 = arith.constant 128 : i32
      %35 = vector.broadcast %c128_i32 : i32 to vector<1x128xi32>
      %36 = arith.muli %34, %35 : vector<1x128xi32>
      %37 = arith.addi %36, %3 : vector<1x128xi32>
      %c16_i32 = arith.constant 16 : i32
      %38 = vector.broadcast %c16_i32 : i32 to vector<1x128xi32>
      %39 = arith.cmpi slt, %37, %38 : vector<1x128xi32>
      %cst_11 = arith.constant 0.000000e+00 : f32
      %40 = vector.broadcast %cst_11 : f32 to vector<1x128xf32>
      %41 = arith.select %39, %24, %40 : vector<1x128xi1>, vector<1x128xf32>
      %cst_12 = arith.constant dense<0.000000e+00> : vector<128xf32>
      %42 = vector.multi_reduction <add>, %41, %cst_12 [0] : vector<1x128xf32> to vector<128xf32>
      %43 = vector.shape_cast %42 : vector<128xf32> to vector<1x128xf32>
      %44 = vector.shape_cast %43 : vector<1x128xf32> to vector<1x128xf32>
      %45 = vector.broadcast %44 : vector<1x128xf32> to vector<8x128xf32>
      %c0_13 = arith.constant 0 : index
      %c0_14 = arith.constant 0 : index
      %c0_15 = arith.constant 0 : index
      %46 = vector.load %arg3[%c0_13, %c0_14, %c0_15] : memref<1x8x128xf32, #tpu.memory_space<vmem>>, vector<1x8x128xf32>
      %47 = vector.shape_cast %46 : vector<1x8x128xf32> to vector<8x128xf32>
      %48 = vector.shape_cast %45 : vector<8x128xf32> to vector<1x8x128xf32>
      tpu.vector_store %arg3[%c0_13, %c0_14, %c0_15], %48 {strides = array<i32>} : memref<1x8x128xf32, #tpu.memory_space<vmem>>, vector<1x8x128xf32>,
    } else {
    }
    return
  }
  func.func @transform_0(%arg0: i32) -> (i32, i32) {
    %c0_i32 = arith.constant 0 : i32
    %c0_i32_0 = arith.constant 0 : i32
    return %arg0, %c0_i32 : i32, i32
  }
  func.func @transform_1(%arg0: i32) -> (i32, i32) {
    %c0_i32 = arith.constant 0 : i32
    %c0_i32_0 = arith.constant 0 : i32
    return %arg0, %c0_i32 : i32, i32
  }
  func.func @transform_2(%arg0: i32) -> (i32, i32, i32) {
    %c0_i32 = arith.constant 0 : i32
    %c0_i32_0 = arith.constant 0 : i32
    %c0_i32_1 = arith.constant 0 : i32
    return %arg0, %c0_i32, %c0_i32_0 : i32, i32, i32
  }
}

</mosaic_0001>

<llo_original>
// kernel: label_smoothing_loss.1
$region0: #{label_smoothing_loss.1}
  #allocation0 [shape = 'u32[]', space=smem, size = 0x4, offset = 0x4, fixed_abs, tag = 'smem constant byte address 0x4 - core index']
  #allocation1 [shape = 'u32[144,128]{1,0:T(1,128)}', space=vmem, size = 0x12000, scoped, tag = 'internal scratch']
  %s0 = inlined_call_operand.vmem [shape: f32[1,128], index: 0, kind: input, shape index: {}]
  %s1 = inlined_call_operand.vmem [shape: s8[1,128], index: 1, kind: input, shape index: {}]
  %s2 = inlined_call_operand.vmem [shape: f32[1,8,128], index: 2, kind: output, shape index: {}]
  %s3 = sld [smem:[#allocation0]]
  $region26: #{label_smoothing_loss.1} parent=0
    _
  %s5 = ssub.s32 1, %s3
  %s6 = scalar_select 0, %s5, %s3
  // Predicated region
  $region2: #{label_smoothing_loss.1} parent=0 // pred_check
    _
  $region3: #{label_smoothing_loss.1} parent=0 // pred_check_branch
    %8 = sbr.rel (0) target = $region5
  $region4: #{label_smoothing_loss.1} parent=0 // pred_region
    _
  $region5: #{label_smoothing_loss.1} parent=0 // pred_fallthru
    _
  // Predicated region
  $region6: #{label_smoothing_loss.1} parent=0 // pred_check
    _
  $region7: #{label_smoothing_loss.1} parent=0 // pred_check_branch
    %10 = sbr.rel (0) target = $region9
  $region8: #{label_smoothing_loss.1} parent=0 // pred_region
    _
  $region9: #{label_smoothing_loss.1} parent=0 // pred_fallthru
    _
  %v11 = vld [vmem:[%s0] sm:$0x1]
  %v12 = vld [vmem:[%s1] sm:$0x1]
  %v13 = vunpack.c.0.s8 %v12
  %v14 = vcvt.s32.f32 %v13
  %v15 = vlaneseq
  %v16 = vand.u32 %v15, 127
  %v17 = vand.u32 %v16, 1
  %vm18 = vcmp.eq.s32.totalorder %v17, 0
  %19 = vrot.lane.b32.xlu0 %v11, 127
  %v20 = vpop.permute.xlu0 %19
  %21 = vrot.lane.b32.xlu0 %v11, 1
  %v22 = vpop.permute.xlu0 %21
  %v23 = vsel %vm18, %v20, %v22
  %v24 = vmax.f32 %v11, %v23
  %v25 = vsub.f32 %v11, %v23
  %v26 = vand.u32 2147483647, %v25
  %v27 = vsub.f32 0.0, %v26
  %v28 = vmul.f32 %v27, 1.442695
  %v29 = vpow.pop %v28
  %v30 = vadd.f32 %v29, 1.0
  %v31 = vlog2.pop %v30
  %v32 = vmul.f32 %v31, 0.6931472
  %v33 = vmul.f32 -0.5, %v29
  %v34 = vadd.f32 %v33, 1.0
  %v35 = vmul.f32 %v34, %v29
  %v36 = vand.u32 2147483647, %v29
  %vm37 = vcmp.lt.f32.partialorder %v36, 0.0004427343
  %v38 = vsel %vm37, %v35, %v32
  %v39 = vadd.f32 %v24, %v38
  %v40 = vmul.f32 %v14, 0.8
  %v41 = vadd.f32 %v40, 0.1
  %v42 = vsub.f32 %v11, %v39
  %v43 = vmul.f32 %v42, %v41
  %p44 = scmp.ne.s32.totalorder 0, 0
  // Predicated region
  $region10: #{label_smoothing_loss.1} parent=0 // pred_check
    %p45 = pneg %p44
  $region11: #{label_smoothing_loss.1} parent=0 // pred_check_branch
    %47 = sbr.rel (%p45) target = $region13
  $region12: #{label_smoothing_loss.1} parent=0 // pred_region
    %v48 = vadd.f32 %v43, 0.0
    %v50 = vlaneseq
    %v51 = vshrl.u32 %v50, 7
    %v52 = vsub.s32 0, %v51
    %v53 = vrot.slane %v48, %v52
    %55 = vst [vmem:[%s2] sm:$0xff] %v53
  $region13: #{label_smoothing_loss.1} parent=0 // pred_fallthru
    _
  %p56 = scmp.eq.s32.totalorder 0, 0
  // Predicated region
  $region14: #{label_smoothing_loss.1} parent=0 // pred_check
    %p57 = pneg %p56
  $region15: #{label_smoothing_loss.1} parent=0 // pred_check_branch
    %59 = sbr.rel (%p57) target = $region17
  $region16: #{label_smoothing_loss.1} parent=0 // pred_region
    %v60 = vlaneseq
    %v61 = vshrl.u32 %v60, 7
    %v62 = vstv 0
    %v63 = vadd.s32 %v62, %v61
    %v64 = vmul.u32 %v63, 128
    %v65 = vadd.s32 %v64, %v16
    %vm66 = vcmp.lt.s32.totalorder %v65, 16
    %v67 = vsel %vm66, %v43, 0.0
    %v68 = vadd.f32 %v67, 0.0
    %v69 = vlaneseq
    %v70 = vshrl.u32 %v69, 7
    %v71 = vsub.s32 0, %v70
    %v72 = vrot.slane %v68, %v71
    %73 = vst [vmem:[%s2] sm:$0xff] %v72
  $region17: #{label_smoothing_loss.1} parent=0 // pred_fallthru
    _
  // Predicated region
  $region18: #{label_smoothing_loss.1} parent=0 // pred_check
    _
  $region19: #{label_smoothing_loss.1} parent=0 // pred_check_branch
    %75 = sbr.rel (0) target = $region21
  $region20: #{label_smoothing_loss.1} parent=0 // pred_region
    _
  $region21: #{label_smoothing_loss.1} parent=0 // pred_fallthru
    _
  // Predicated region
  $region22: #{label_smoothing_loss.1} parent=0 // pred_check
    _
  $region23: #{label_smoothing_loss.1} parent=0 // pred_check_branch
    %77 = sbr.rel (0) target = $region25
  $region24: #{label_smoothing_loss.1} parent=0 // pred_region
    _
  $region25: #{label_smoothing_loss.1} parent=0 // pred_fallthru
    _

</llo_original>
